<compile_context>
chip_gen: v7x
topology: tpu7x:2x2x1
jax: 0.10.0
libtpu: 0.0.40
codegen_flags: <defaults>
</compile_context>

<pallas_src>
import functools

import jax
import jax.numpy as jnp
from jax.experimental import pallas as pl
from jax.experimental.pallas import tpu as pltpu


def _round_up(x, m):
    return (x + m - 1) // m * m


def _mlp_kernel(x_ref, w_in_ref, b_in_ref, w_hid_ref, b_hid_ref,
                w_out_ref, b_out_ref, o_ref, *, depth, compute_dtype):
    # Input layer: Linear + ReLU. MXU accumulates f32; bias-add in f32; the
    # resulting activation is stored in compute_dtype (bf16 fast path) so
    # hidden layers never round-trip through f32 vregs.
    x = x_ref[...].astype(compute_dtype)
    y = jnp.dot(x, w_in_ref[...], preferred_element_type=jnp.float32)
    h = jnp.maximum(y + b_in_ref[...].astype(jnp.float32), 0.0).astype(compute_dtype)

    # Hidden layers: Linear + Dropout(p=0.0) (identity) + ReLU.
    def body(i, h):
        y = jnp.dot(h, w_hid_ref[i], preferred_element_type=jnp.float32)
        return jnp.maximum(y + b_hid_ref[i].astype(jnp.float32),
                           0.0).astype(compute_dtype)

    # Small unroll gives the LLO scheduler visibility (overlap layer i's
    # bias/ReLU with layer i+1's MXU pushes) without vreg-pressure blowup.
    h = jax.lax.fori_loop(0, depth, body, h,
                          unroll=depth if depth <= 4 else 2)

    # Output layer: Linear only (no final activation).
    out = jnp.dot(h, w_out_ref[...], preferred_element_type=jnp.float32)
    o_ref[...] = (out + b_out_ref[...].astype(jnp.float32)).astype(o_ref.dtype)


def prepare_params(params, *, use_bf16=True):
    """Pad feature dims to multiples of 128 and cast matmul operands ONCE.

    Call at init time, not per forward: this is a full read+write pass over
    the entire weight stack. Zero-padded rows/columns are exact no-ops through
    Linear + ReLU (biases padded with zeros).
    """
    w_in, b_in = params["w_in"], params["b_in"]          # (d_in, H), (1, H)
    w_hid, b_hid = params["w_hid"], params["b_hid"]      # (depth, H, H), (depth, 1, H)
    w_out, b_out = params["w_out"], params["b_out"]      # (H, d_out), (1, d_out)
    d_in, H = w_in.shape
    depth = int(w_hid.shape[0])
    d_out = w_out.shape[1]
    assert depth >= 1, "depth must be >= 1"

    compute_dtype = jnp.bfloat16 if use_bf16 else jnp.float32
    d_in_p, H_p, d_out_p = (_round_up(d, 128) for d in (d_in, H, d_out))
    # TODO(synk): benchmark padding H to 256 on v6e/v7x (256x256 MXU) when the
    # 4x weight bytes still fit single-buffered VMEM; keep 128 on v5e.

    prepared = {
        "w_in": jnp.pad(w_in, ((0, d_in_p - d_in), (0, H_p - H))).astype(compute_dtype),
        "b_in": jnp.pad(b_in, ((0, 0), (0, H_p - H))),
        "w_hid": jnp.pad(w_hid, ((0, 0), (0, H_p - H), (0, H_p - H))).astype(compute_dtype),
        "b_hid": jnp.pad(b_hid, ((0, 0), (0, 0), (0, H_p - H))),
        "w_out": jnp.pad(w_out, ((0, H_p - H), (0, d_out_p - d_out))).astype(compute_dtype),
        "b_out": jnp.pad(b_out, ((0, 0), (0, d_out_p - d_out))),
    }
    meta = dict(depth=depth, d_in=d_in, d_out=d_out,
                d_in_p=d_in_p, H_p=H_p, d_out_p=d_out_p,
                compute_dtype=compute_dtype)
    return prepared, meta


def mlp_simple_forward(x, prepared, meta, *, block_b=None, trim_output=True):
    """x: (B, input_dim) float32. `prepared`/`meta` from prepare_params()."""
    B, d_in = x.shape
    assert d_in == meta["d_in"], "input_dim mismatch with prepared params"
    depth = meta["depth"]
    d_in_p, H_p, d_out_p = meta["d_in_p"], meta["H_p"], meta["d_out_p"]
    d_out = meta["d_out"]
    compute_dtype = meta["compute_dtype"]

    # Only the input tile is padded per call (cheap: B x d_in).
    xp = jnp.pad(x, ((0, 0), (0, d_in_p - d_in))) if d_in_p != d_in else x

    # Batch tile: aim for >= ~4 grid steps so each v7x TensorCore gets >= 2
    # steps (x/out DMA overlap is restored); cap at 512 rows so single-TC
    # chips (v5e/v6e) amortize the ~0.35us per-step overhead with fat tiles.
    if block_b is None:
        tb = max(8, min(_round_up(pl.cdiv(B, 4), 8), 512))
    else:
        tb = max(8, min(_round_up(block_b, 8), _round_up(B, 8)))
    grid = (pl.cdiv(B, tb),)

    # VMEM budget: weights single-buffered (Buffered(1) specs below),
    # x/out tiles double-buffered, activations + f32 matmul temps.
    wbytes = 2 if compute_dtype == jnp.bfloat16 else 4
    weight_bytes = (d_in_p * H_p + depth * H_p * H_p + H_p * d_out_p) * wbytes \
                   + ((depth + 1) * H_p + d_out_p) * 4
    io_tile_bytes = 2 * (tb * d_in_p + tb * d_out_p) * 4
    act_bytes = tb * H_p * (2 * wbytes + 8)
    est = weight_bytes + io_tile_bytes + act_bytes

    try:
        phys_vmem = int(pltpu.get_tpu_info().vmem_capacity_bytes)
    except Exception:
        phys_vmem = 64 * 2**20
    vmem_cap = phys_vmem * 3 // 4   # headroom for Mosaic scratch / semaphores
    if est > vmem_cap:
        # TODO(synk): weight-streaming fallback (w_hid kept in HBM via
        # memory_space=pl.ANY, per-layer double-buffered pltpu.make_async_copy)
        # for weight stacks that exceed the VMEM budget.
        raise ValueError(
            f"MLP working set (~{est >> 20} MiB) exceeds the VMEM budget "
            f"(~{vmem_cap >> 20} MiB); reduce hidden_dim/depth/block_b or add "
            f"a weight-streaming path.")
    vmem_limit = int(min(vmem_cap, max(32 * 2**20, int(est * 1.25))))

    flops = 2 * B * (d_in_p * H_p + depth * H_p * H_p + H_p * d_out_p)
    bytes_accessed = B * (d_in_p + d_out_p) * 4 + weight_bytes

    kernel = functools.partial(_mlp_kernel, depth=depth,
                               compute_dtype=compute_dtype)
    # Constant index_map => DMA'd once; single VMEM copy instead of 2.
    resident = dict(pipeline_mode=pl.Buffered(1))

    out = pl.pallas_call(
        kernel,
        out_shape=jax.ShapeDtypeStruct((B, d_out_p), x.dtype),
        grid_spec=pltpu.PrefetchScalarGridSpec(
            num_scalar_prefetch=0,
            grid=grid,
            in_specs=[
                pl.BlockSpec((tb, d_in_p), lambda i: (i, 0)),                          # x tile
                pl.BlockSpec((d_in_p, H_p), lambda i: (0, 0), **resident),             # w_in
                pl.BlockSpec((1, H_p), lambda i: (0, 0), **resident),                  # b_in
                pl.BlockSpec((depth, H_p, H_p), lambda i: (0, 0, 0), **resident),      # w_hid
                pl.BlockSpec((depth, 1, H_p), lambda i: (0, 0, 0), **resident),        # b_hid
                pl.BlockSpec((H_p, d_out_p), lambda i: (0, 0), **resident),            # w_out
                pl.BlockSpec((1, d_out_p), lambda i: (0, 0), **resident),              # b_out
            ],
            out_specs=pl.BlockSpec((tb, d_out_p), lambda i: (i, 0)),
        ),
        compiler_params=pltpu.CompilerParams(
            dimension_semantics=("parallel",),
            vmem_limit_bytes=vmem_limit),
        cost_estimate=pl.CostEstimate(flops=flops, transcendentals=0,
                                      bytes_accessed=bytes_accessed),
    )(xp, prepared["w_in"], prepared["b_in"], prepared["w_hid"],
      prepared["b_hid"], prepared["w_out"], prepared["b_out"])

    # trim_output=False lets callers consume the lane-dense (B, d_out_p) slab
    # directly and skip this extra HBM copy.
    return out[:, :d_out] if (trim_output and d_out_p != d_out) else out


def init_params(key, input_dim, hidden_dim, output_dim, depth):
    """Deterministic synthetic parameters (uniform, PyTorch-Linear-like scale)."""
    ks = jax.random.split(key, 2 * depth + 4)

    def lin(kw, kb, fan_in, fan_out):
        bound = 1.0 / jnp.sqrt(fan_in)
        w = jax.random.uniform(kw, (fan_in, fan_out), jnp.float32, -bound, bound)
        b = jax.random.uniform(kb, (1, fan_out), jnp.float32, -bound, bound)
        return w, b

    w_in, b_in = lin(ks[0], ks[1], input_dim, hidden_dim)
    w_hid, b_hid = [], []
    for i in range(depth):
        w, b = lin(ks[2 + 2 * i], ks[3 + 2 * i], hidden_dim, hidden_dim)
        w_hid.append(w)
        b_hid.append(b)
    w_out, b_out = lin(ks[2 + 2 * depth], ks[3 + 2 * depth], hidden_dim, output_dim)
    return {
        "w_in": w_in, "b_in": b_in,
        "w_hid": jnp.stack(w_hid, 0), "b_hid": jnp.stack(b_hid, 0),
        "w_out": w_out, "b_out": b_out,
    }


def mlp_simple_ref(x, params, depth):
    h = jnp.maximum(x @ params["w_in"] + params["b_in"], 0.0)
    for i in range(depth):
        h = jnp.maximum(h @ params["w_hid"][i] + params["b_hid"][i], 0.0)
    return h @ params["w_out"] + params["b_out"]


if __name__ == "__main__":
    # Small shapes: batch=256, input_dim=48, hidden_dim=96, output_dim=8, depth=3.
    # Auto tile -> tb=64, 4-step parallel grid (DMA overlap + both v7x cores).
    B, D_IN, H, D_OUT, DEPTH = 256, 48, 96, 8, 3

    key = jax.random.PRNGKey(0)
    kx, kp = jax.random.split(key)
    x = jax.random.normal(kx, (B, D_IN), jnp.float32)
    params = init_params(kp, D_IN, H, D_OUT, DEPTH)
    ref = mlp_simple_ref(x, params, DEPTH)

    # f32-matmul path.
    prep_f32, meta_f32 = prepare_params(params, use_bf16=False)
    out_f32 = jax.block_until_ready(mlp_simple_forward(x, prep_f32, meta_f32))
    assert out_f32.shape == (B, D_OUT)
    assert jnp.allclose(out_f32, ref, atol=1e-2, rtol=1e-2)

    # bf16-matmul / f32-accumulate fast path (looser tolerance vs f32 reference).
    prep_bf16, meta_bf16 = prepare_params(params, use_bf16=True)
    out_bf16 = jax.block_until_ready(mlp_simple_forward(x, prep_bf16, meta_bf16))
    assert out_bf16.shape == (B, D_OUT)
    assert jnp.allclose(out_bf16, ref, atol=1e-1, rtol=1e-1)

    # Non-divisible batch (partial last block; padded rows cannot leak into
    # valid rows because the MLP is row-wise and Pallas masks the writeback).
    x2 = jax.random.normal(jax.random.PRNGKey(1), (200, D_IN), jnp.float32)
    out2 = jax.block_until_ready(mlp_simple_forward(x2, prep_f32, meta_f32))
    assert out2.shape == (200, D_OUT)
    assert jnp.allclose(out2, mlp_simple_ref(x2, params, DEPTH), atol=1e-2, rtol=1e-2)

    print("KERNEL_OK")
</pallas_src>

<mosaic_0001>
module attributes {stable_mosaic.version = 11 : i64} {
  func.func @_mlp_kernel(%arg0: i32, %arg1: memref<64x128xf32, #tpu.memory_space<vmem>>, %arg2: memref<128x128xf32, #tpu.memory_space<vmem>>, %arg3: memref<1x128xf32, #tpu.memory_space<vmem>>, %arg4: memref<3x128x128xf32, #tpu.memory_space<vmem>>, %arg5: memref<3x1x128xf32, #tpu.memory_space<vmem>>, %arg6: memref<128x128xf32, #tpu.memory_space<vmem>>, %arg7: memref<1x128xf32, #tpu.memory_space<vmem>>, %arg8: memref<64x128xf32, #tpu.memory_space<vmem>>) attributes {dimension_semantics = [#tpu.dimension_semantics<parallel>], iteration_bounds = array<i64: 4>, scalar_prefetch = 0 : i64, scratch_operands = 0 : i64, tpu.core_type = #tpu.core_type<tc>, window_params = [{transform_indices = @transform_0, window_bounds = array<i64: 64, 128>}, {pipeline_mode = #tpu.pipeline_mode<synchronous>, transform_indices = @transform_1, window_bounds = array<i64: 128, 128>}, {pipeline_mode = #tpu.pipeline_mode<synchronous>, transform_indices = @transform_2, window_bounds = array<i64: 1, 128>}, {pipeline_mode = #tpu.pipeline_mode<synchronous>, transform_indices = @transform_3, window_bounds = array<i64: 3, 128, 128>}, {pipeline_mode = #tpu.pipeline_mode<synchronous>, transform_indices = @transform_4, window_bounds = array<i64: 3, 1, 128>}, {pipeline_mode = #tpu.pipeline_mode<synchronous>, transform_indices = @transform_5, window_bounds = array<i64: 128, 128>}, {pipeline_mode = #tpu.pipeline_mode<synchronous>, transform_indices = @transform_6, window_bounds = array<i64: 1, 128>}, {transform_indices = @transform_7, window_bounds = array<i64: 64, 128>}]} {
    %c0 = arith.constant 0 : index
    %c0_0 = arith.constant 0 : index
    %0 = vector.load %arg1[%c0, %c0_0] : memref<64x128xf32, #tpu.memory_space<vmem>>, vector<64x128xf32>
    %c0_1 = arith.constant 0 : index
    %c0_2 = arith.constant 0 : index
    %1 = vector.load %arg2[%c0_1, %c0_2] : memref<128x128xf32, #tpu.memory_space<vmem>>, vector<128x128xf32>
    %cst = arith.constant dense<0.000000e+00> : vector<64x128xf32>
    %2 = tpu.matmul %0, %1, %cst {dimension_numbers = #tpu.dot_dimension_numbers<[1], [0], [0], [1], [0, 0, 1, 1], [], []>} : vector<64x128xf32>, vector<128x128xf32>, vector<64x128xf32> -> vector<64x128xf32>
    %c0_3 = arith.constant 0 : index
    %c0_4 = arith.constant 0 : index
    %3 = vector.load %arg3[%c0_3, %c0_4] : memref<1x128xf32, #tpu.memory_space<vmem>>, vector<1x128xf32>
    %4 = vector.broadcast %3 : vector<1x128xf32> to vector<64x128xf32>
    %5 = arith.addf %2, %4 : vector<64x128xf32>
    %cst_5 = arith.constant 0.000000e+00 : f32
    %6 = vector.broadcast %cst_5 : f32 to vector<64x128xf32>
    %7 = arith.maximumf %5, %6 : vector<64x128xf32>
    %c0_i32 = arith.constant 0 : i32
    %8 = arith.index_cast %c0_i32 : i32 to index
    %c0_6 = arith.constant 0 : index
    %c0_7 = arith.constant 0 : index
    %9 = vector.load %arg4[%8, %c0_6, %c0_7] : memref<3x128x128xf32, #tpu.memory_space<vmem>>, vector<1x128x128xf32>
    %10 = vector.shape_cast %9 : vector<1x128x128xf32> to vector<128x128xf32>
    %cst_8 = arith.constant dense<0.000000e+00> : vector<64x128xf32>
    %11 = tpu.matmul %7, %10, %cst_8 {dimension_numbers = #tpu.dot_dimension_numbers<[1], [0], [0], [1], [0, 0, 1, 1], [], []>} : vector<64x128xf32>, vector<128x128xf32>, vector<64x128xf32> -> vector<64x128xf32>
    %12 = arith.index_cast %c0_i32 : i32 to index
    %c0_9 = arith.constant 0 : index
    %c0_10 = arith.constant 0 : index
    %13 = vector.load %arg5[%12, %c0_9, %c0_10] : memref<3x1x128xf32, #tpu.memory_space<vmem>>, vector<1x1x128xf32>
    %14 = vector.shape_cast %13 : vector<1x1x128xf32> to vector<1x128xf32>
    %15 = vector.broadcast %14 : vector<1x128xf32> to vector<64x128xf32>
    %16 = arith.addf %11, %15 : vector<64x128xf32>
    %cst_11 = arith.constant 0.000000e+00 : f32
    %17 = vector.broadcast %cst_11 : f32 to vector<64x128xf32>
    %18 = arith.maximumf %16, %17 : vector<64x128xf32>
    %c1_i32 = arith.constant 1 : i32
    %19 = arith.index_cast %c1_i32 : i32 to index
    %c0_12 = arith.constant 0 : index
    %c0_13 = arith.constant 0 : index
    %20 = vector.load %arg4[%19, %c0_12, %c0_13] : memref<3x128x128xf32, #tpu.memory_space<vmem>>, vector<1x128x128xf32>
    %21 = vector.shape_cast %20 : vector<1x128x128xf32> to vector<128x128xf32>
    %cst_14 = arith.constant dense<0.000000e+00> : vector<64x128xf32>
    %22 = tpu.matmul %18, %21, %cst_14 {dimension_numbers = #tpu.dot_dimension_numbers<[1], [0], [0], [1], [0, 0, 1, 1], [], []>} : vector<64x128xf32>, vector<128x128xf32>, vector<64x128xf32> -> vector<64x128xf32>
    %23 = arith.index_cast %c1_i32 : i32 to index
    %c0_15 = arith.constant 0 : index
    %c0_16 = arith.constant 0 : index
    %24 = vector.load %arg5[%23, %c0_15, %c0_16] : memref<3x1x128xf32, #tpu.memory_space<vmem>>, vector<1x1x128xf32>
    %25 = vector.shape_cast %24 : vector<1x1x128xf32> to vector<1x128xf32>
    %26 = vector.broadcast %25 : vector<1x128xf32> to vector<64x128xf32>
    %27 = arith.addf %22, %26 : vector<64x128xf32>
    %cst_17 = arith.constant 0.000000e+00 : f32
    %28 = vector.broadcast %cst_17 : f32 to vector<64x128xf32>
    %29 = arith.maximumf %27, %28 : vector<64x128xf32>
    %c2_i32 = arith.constant 2 : i32
    %30 = arith.index_cast %c2_i32 : i32 to index
    %c0_18 = arith.constant 0 : index
    %c0_19 = arith.constant 0 : index
    %31 = vector.load %arg4[%30, %c0_18, %c0_19] : memref<3x128x128xf32, #tpu.memory_space<vmem>>, vector<1x128x128xf32>
    %32 = vector.shape_cast %31 : vector<1x128x128xf32> to vector<128x128xf32>
    %cst_20 = arith.constant dense<0.000000e+00> : vector<64x128xf32>
    %33 = tpu.matmul %29, %32, %cst_20 {dimension_numbers = #tpu.dot_dimension_numbers<[1], [0], [0], [1], [0, 0, 1, 1], [], []>} : vector<64x128xf32>, vector<128x128xf32>, vector<64x128xf32> -> vector<64x128xf32>
    %34 = arith.index_cast %c2_i32 : i32 to index
    %c0_21 = arith.constant 0 : index
    %c0_22 = arith.constant 0 : index
    %35 = vector.load %arg5[%34, %c0_21, %c0_22] : memref<3x1x128xf32, #tpu.memory_space<vmem>>, vector<1x1x128xf32>
    %36 = vector.shape_cast %35 : vector<1x1x128xf32> to vector<1x128xf32>
    %37 = vector.broadcast %36 : vector<1x128xf32> to vector<64x128xf32>
    %38 = arith.addf %33, %37 : vector<64x128xf32>
    %cst_23 = arith.constant 0.000000e+00 : f32
    %39 = vector.broadcast %cst_23 : f32 to vector<64x128xf32>
    %40 = arith.maximumf %38, %39 : vector<64x128xf32>
    %c3_i32 = arith.constant 3 : i32
    %c0_24 = arith.constant 0 : index
    %c0_25 = arith.constant 0 : index
    %41 = vector.load %arg6[%c0_24, %c0_25] : memref<128x128xf32, #tpu.memory_space<vmem>>, vector<128x128xf32>
    %cst_26 = arith.constant dense<0.000000e+00> : vector<64x128xf32>
    %42 = tpu.matmul %40, %41, %cst_26 {dimension_numbers = #tpu.dot_dimension_numbers<[1], [0], [0], [1], [0, 0, 1, 1], [], []>} : vector<64x128xf32>, vector<128x128xf32>, vector<64x128xf32> -> vector<64x128xf32>
    %c0_27 = arith.constant 0 : index
    %c0_28 = arith.constant 0 : index
    %43 = vector.load %arg7[%c0_27, %c0_28] : memref<1x128xf32, #tpu.memory_space<vmem>>, vector<1x128xf32>
    %44 = vector.broadcast %43 : vector<1x128xf32> to vector<64x128xf32>
    %45 = arith.addf %42, %44 : vector<64x128xf32>
    %c0_29 = arith.constant 0 : index
    %c0_30 = arith.constant 0 : index
    %46 = vector.load %arg8[%c0_29, %c0_30] : memref<64x128xf32, #tpu.memory_space<vmem>>, vector<64x128xf32>
    tpu.vector_store %arg8[%c0_29, %c0_30], %45 {strides = array<i32>} : memref<64x128xf32, #tpu.memory_space<vmem>>, vector<64x128xf32>,
    return
  }
  func.func @transform_0(%arg0: i32) -> (i32, i32) {
    %c0_i32 = arith.constant 0 : i32
    %c0_i32_0 = arith.constant 0 : i32
    return %arg0, %c0_i32 : i32, i32
  }
  func.func @transform_1(%arg0: i32) -> (i32, i32) {
    %c0_i32 = arith.constant 0 : i32
    %c0_i32_0 = arith.constant 0 : i32
    %c0_i32_1 = arith.constant 0 : i32
    return %c0_i32, %c0_i32_0 : i32, i32
  }
  func.func @transform_2(%arg0: i32) -> (i32, i32) {
    %c0_i32 = arith.constant 0 : i32
    %c0_i32_0 = arith.constant 0 : i32
    %c0_i32_1 = arith.constant 0 : i32
    return %c0_i32, %c0_i32_0 : i32, i32
  }
  func.func @transform_3(%arg0: i32) -> (i32, i32, i32) {
    %c0_i32 = arith.constant 0 : i32
    %c0_i32_0 = arith.constant 0 : i32
    %c0_i32_1 = arith.constant 0 : i32
    %c0_i32_2 = arith.constant 0 : i32
    return %c0_i32, %c0_i32_0, %c0_i32_1 : i32, i32, i32
  }
  func.func @transform_4(%arg0: i32) -> (i32, i32, i32) {
    %c0_i32 = arith.constant 0 : i32
    %c0_i32_0 = arith.constant 0 : i32
    %c0_i32_1 = arith.constant 0 : i32
    %c0_i32_2 = arith.constant 0 : i32
    return %c0_i32, %c0_i32_0, %c0_i32_1 : i32, i32, i32
  }
  func.func @transform_5(%arg0: i32) -> (i32, i32) {
    %c0_i32 = arith.constant 0 : i32
    %c0_i32_0 = arith.constant 0 : i32
    %c0_i32_1 = arith.constant 0 : i32
    return %c0_i32, %c0_i32_0 : i32, i32
  }
  func.func @transform_6(%arg0: i32) -> (i32, i32) {
    %c0_i32 = arith.constant 0 : i32
    %c0_i32_0 = arith.constant 0 : i32
    %c0_i32_1 = arith.constant 0 : i32
    return %c0_i32, %c0_i32_0 : i32, i32
  }
  func.func @transform_7(%arg0: i32) -> (i32, i32) {
    %c0_i32 = arith.constant 0 : i32
    %c0_i32_0 = arith.constant 0 : i32
    return %arg0, %c0_i32 : i32, i32
  }
}

</mosaic_0001>

<llo_original>
// kernel: tpu_custom_call.1
$region0: #{tpu_custom_call.1}
  #allocation0 [shape = 'u32[]', space=smem, size = 0x4, offset = 0x4, fixed_abs, tag = 'smem constant byte address 0x4 - core index']
  #allocation1 [shape = 'u32[144,128]{1,0:T(1,128)}', space=vmem, size = 0x12000, scoped, tag = 'internal scratch']
  %s0 = inlined_call_operand.hbm [shape: f32[256,128], index: 0, kind: input, shape index: {}]
  %s1 = inlined_call_operand.hbm [shape: f32[128,128], index: 1, kind: input, shape index: {}]
  %s2 = inlined_call_operand.vmem [shape: f32[1,128], index: 2, kind: input, shape index: {}]
  %s3 = inlined_call_operand.hbm [shape: f32[3,128,128], index: 3, kind: input, shape index: {}]
  %s4 = inlined_call_operand.vmem [shape: f32[3,1,128], index: 4, kind: input, shape index: {}]
  %s5 = inlined_call_operand.hbm [shape: f32[128,128], index: 5, kind: input, shape index: {}]
  %s6 = inlined_call_operand.vmem [shape: f32[1,128], index: 6, kind: input, shape index: {}]
  %s7 = inlined_call_operand.hbm [shape: f32[256,128], index: 7, kind: output, shape index: {}]
  %s8 = sld [smem:[#allocation0]]
  $region77: #{tpu_custom_call.1} parent=0
    _
  %s10 = ssub.s32 1, %s8
  %s11 = scalar_select 0, %s10, %s8
  $region1: #{tpu_custom_call.1} parent=0
    #allocation2 [shape = 'u8[65536]{0}', space=vmem, size = 0x10000, scoped, tag = 'input window, operand 0']
    #allocation3 [shape = 's32[2]{0}', space=sflag, size = 0x8, scoped, tag = 'scoped memory for tpu_custom_call.1']
    #allocation4 [shape = 's32[2]{0}', space=sflag, size = 0x8, scoped, tag = 'scoped memory for tpu_custom_call.1']
    #allocation5 [shape = 'u8[65536]{0}', space=vmem, size = 0x10000, scoped, tag = 'input window, operand 1, single buffered']
    #allocation6 [shape = 's32[1]{0}', space=sflag, size = 0x4, scoped, tag = 'scoped memory for tpu_custom_call.1']
    #allocation7 [shape = 'u8[196608]{0}', space=vmem, size = 0x30000, scoped, tag = 'input window, operand 3, single buffered']
    #allocation8 [shape = 'u8[65536]{0}', space=vmem, size = 0x10000, scoped, tag = 'input window, operand 5, single buffered']
    #allocation9 [shape = 's32[1]{0}', space=sflag, size = 0x4, scoped, tag = 'scoped memory for tpu_custom_call.1']
    #allocation10 [shape = 'u8[65536]{0}', space=vmem, size = 0x10000, scoped, tag = 'output window, operand 0']
    %12 = vsyncpa [#allocation3], 0
    %s13 = scalar_lea.sflag [#allocation3], 1
    %14 = vsyncpa %s13, 0
    %15 = vsyncpa [#allocation6], 0
    %16 = vsyncpa [#allocation9], 0
    %17 = vsyncpa [#allocation4], 0
    %s18 = scalar_lea.sflag [#allocation4], 1
    %19 = vsyncpa %s18, 0
    loop: start=0, step=1, limit=6
    $region2: #{tpu_custom_call.1} parent=1 // loop_pre_header
      _
    $region3: #{tpu_custom_call.1} parent=1 // loop_header
      %s21 = sphi 0, %s25
      %p22 = scmp.ge.s32.totalorder %s21, 6
      %s31 = sphi 0, %s33
      %s34 = sphi 0, %s31
      %s35 = sphi 0, %s34
      %s51 = sphi 0, %s35
      %s55 = sphi 0, %s55
      %s57 = sphi 0, %s55
      %s58 = sphi 0, %s57
      %s72 = sphi 0, %s58
      %s76 = sphi 0, %s76
      %s78 = sphi 0, %s76
      %s79 = sphi 0, %s78
      %s93 = sphi 0, %s79
      %s97 = sphi 0, %s97
      %s99 = sphi 0, %s97
      %s100 = sphi 0, %s99
      %s114 = sphi 0, %s100
      %s118 = sphi 0, %s118
      %s120 = sphi 0, %s118
      %s121 = sphi 0, %s120
      %s135 = sphi 0, %s121
      %s139 = sphi 0, %s139
      %s141 = sphi 0, %s139
      %s142 = sphi 0, %s141
      %s156 = sphi 0, %s142
      %s160 = sphi 0, %s160
      %s162 = sphi 0, %s160
      %s163 = sphi 0, %s162
      %s177 = sphi 0, %s163
      %s183 = sphi 0, %s185
      %s186 = sphi 0, %s183
      %s187 = sphi 0, %s186
      %s203 = sphi 0, %s187
    $region4: #{tpu_custom_call.1} parent=1 // loop_header_branch
      %24 = sbr.rel (%p22) target = $region8
    $region5: #{tpu_custom_call.1} parent=1 // loop_body
      %s26 = ssub.s32 %s21, 1
      %s27 = ssub.s32 %s21, 2
      %s28 = sadd.s32 %s21, 1
      %s29 = ssub.s32 %s21, %s28
      %p30 = scmp.eq.s32.totalorder %s29, 0
      %s32 = sadd.s32 %s31, 1
      %s33 = scalar_select %p30, %s31, %s32
      %p36 = pneg %p30
      %p37 = scmp.eq.s32.totalorder %s21, 3
      %p38 = por %p36, %p37
      %p39 = scmp.ne.s32.totalorder %s31, %s34
      %p40 = scmp.eq.s32.totalorder %s21, 0
      %p41 = por %p39, %p40
      %p42 = scmp.ne.s32.totalorder %s31, %s34
      %p43 = scmp.eq.s32.totalorder %s26, 3
      %p44 = por %p42, %p43
      %p45 = scmp.ne.s32.totalorder %s34, %s35
      %p46 = scmp.eq.s32.totalorder %s26, 0
      %p47 = por %p45, %p46
      %p48 = scmp.ne.s32.totalorder %s34, %s35
      %p49 = scmp.eq.s32.totalorder %s27, 3
      %p50 = por %p48, %p49
      %p52 = scmp.ne.s32.totalorder %s35, %s51
      %p53 = scmp.eq.s32.totalorder %s27, 0
      %p54 = por %p52, %p53
      %s56 = sadd.s32 %s55, 1
      %p59 = scmp.eq.s32.totalorder %s21, 3
      %p60 = scmp.ne.s32.totalorder %s55, %s57
      %p61 = scmp.eq.s32.totalorder %s21, 0
      %p62 = por %p60, %p61
      %p63 = scmp.ne.s32.totalorder %s55, %s57
      %p64 = scmp.eq.s32.totalorder %s26, 3
      %p65 = por %p63, %p64
      %p66 = scmp.ne.s32.totalorder %s57, %s58
      %p67 = scmp.eq.s32.totalorder %s26, 0
      %p68 = por %p66, %p67
      %p69 = scmp.ne.s32.totalorder %s57, %s58
      %p70 = scmp.eq.s32.totalorder %s27, 3
      %p71 = por %p69, %p70
      %p73 = scmp.ne.s32.totalorder %s58, %s72
      %p74 = scmp.eq.s32.totalorder %s27, 0
      %p75 = por %p73, %p74
      %s77 = sadd.s32 %s76, 1
      %p80 = scmp.eq.s32.totalorder %s21, 3
      %p81 = scmp.ne.s32.totalorder %s76, %s78
      %p82 = scmp.eq.s32.totalorder %s21, 0
      %p83 = por %p81, %p82
      %p84 = scmp.ne.s32.totalorder %s76, %s78
      %p85 = scmp.eq.s32.totalorder %s26, 3
      %p86 = por %p84, %p85
      %p87 = scmp.ne.s32.totalorder %s78, %s79
      %p88 = scmp.eq.s32.totalorder %s26, 0
      %p89 = por %p87, %p88
      %p90 = scmp.ne.s32.totalorder %s78, %s79
      %p91 = scmp.eq.s32.totalorder %s27, 3
      %p92 = por %p90, %p91
      %p94 = scmp.ne.s32.totalorder %s79, %s93
      %p95 = scmp.eq.s32.totalorder %s27, 0
      %p96 = por %p94, %p95
      %s98 = sadd.s32 %s97, 1
      %p101 = scmp.eq.s32.totalorder %s21, 3
      %p102 = scmp.ne.s32.totalorder %s97, %s99
      %p103 = scmp.eq.s32.totalorder %s21, 0
      %p104 = por %p102, %p103
      %p105 = scmp.ne.s32.totalorder %s97, %s99
      %p106 = scmp.eq.s32.totalorder %s26, 3
      %p107 = por %p105, %p106
      %p108 = scmp.ne.s32.totalorder %s99, %s100
      %p109 = scmp.eq.s32.totalorder %s26, 0
      %p110 = por %p108, %p109
      %p111 = scmp.ne.s32.totalorder %s99, %s100
      %p112 = scmp.eq.s32.totalorder %s27, 3
      %p113 = por %p111, %p112
      %p115 = scmp.ne.s32.totalorder %s100, %s114
      %p116 = scmp.eq.s32.totalorder %s27, 0
      %p117 = por %p115, %p116
      %s119 = sadd.s32 %s118, 1
      %p122 = scmp.eq.s32.totalorder %s21, 3
      %p123 = scmp.ne.s32.totalorder %s118, %s120
      %p124 = scmp.eq.s32.totalorder %s21, 0
      %p125 = por %p123, %p124
      %p126 = scmp.ne.s32.totalorder %s118, %s120
      %p127 = scmp.eq.s32.totalorder %s26, 3
      %p128 = por %p126, %p127
      %p129 = scmp.ne.s32.totalorder %s120, %s121
      %p130 = scmp.eq.s32.totalorder %s26, 0
      %p131 = por %p129, %p130
      %p132 = scmp.ne.s32.totalorder %s120, %s121
      %p133 = scmp.eq.s32.totalorder %s27, 3
      %p134 = por %p132, %p133
      %p136 = scmp.ne.s32.totalorder %s121, %s135
      %p137 = scmp.eq.s32.totalorder %s27, 0
      %p138 = por %p136, %p137
      %s140 = sadd.s32 %s139, 1
      %p143 = scmp.eq.s32.totalorder %s21, 3
      %p144 = scmp.ne.s32.totalorder %s139, %s141
      %p145 = scmp.eq.s32.totalorder %s21, 0
      %p146 = por %p144, %p145
      %p147 = scmp.ne.s32.totalorder %s139, %s141
      %p148 = scmp.eq.s32.totalorder %s26, 3
      %p149 = por %p147, %p148
      %p150 = scmp.ne.s32.totalorder %s141, %s142
      %p151 = scmp.eq.s32.totalorder %s26, 0
      %p152 = por %p150, %p151
      %p153 = scmp.ne.s32.totalorder %s141, %s142
      %p154 = scmp.eq.s32.totalorder %s27, 3
      %p155 = por %p153, %p154
      %p157 = scmp.ne.s32.totalorder %s142, %s156
      %p158 = scmp.eq.s32.totalorder %s27, 0
      %p159 = por %p157, %p158
      %s161 = sadd.s32 %s160, 1
      %p164 = scmp.eq.s32.totalorder %s21, 3
      %p165 = scmp.ne.s32.totalorder %s160, %s162
      %p166 = scmp.eq.s32.totalorder %s21, 0
      %p167 = por %p165, %p166
      %p168 = scmp.ne.s32.totalorder %s160, %s162
      %p169 = scmp.eq.s32.totalorder %s26, 3
      %p170 = por %p168, %p169
      %p171 = scmp.ne.s32.totalorder %s162, %s163
      %p172 = scmp.eq.s32.totalorder %s26, 0
      %p173 = por %p171, %p172
      %p174 = scmp.ne.s32.totalorder %s162, %s163
      %p175 = scmp.eq.s32.totalorder %s27, 3
      %p176 = por %p174, %p175
      %p178 = scmp.ne.s32.totalorder %s163, %s177
      %p179 = scmp.eq.s32.totalorder %s27, 0
      %p180 = por %p178, %p179
      %s181 = ssub.s32 %s21, %s28
      %p182 = scmp.eq.s32.totalorder %s181, 0
      %s184 = sadd.s32 %s183, 1
      %s185 = scalar_select %p182, %s183, %s184
      %p188 = pneg %p182
      %p189 = scmp.eq.s32.totalorder %s21, 3
      %p190 = por %p188, %p189
      %p191 = scmp.ne.s32.totalorder %s183, %s186
      %p192 = scmp.eq.s32.totalorder %s21, 0
      %p193 = por %p191, %p192
      %p194 = scmp.ne.s32.totalorder %s183, %s186
      %p195 = scmp.eq.s32.totalorder %s26, 3
      %p196 = por %p194, %p195
      %p197 = scmp.ne.s32.totalorder %s186, %s187
      %p198 = scmp.eq.s32.totalorder %s26, 0
      %p199 = por %p197, %p198
      %p200 = scmp.ne.s32.totalorder %s186, %s187
      %p201 = scmp.eq.s32.totalorder %s27, 3
      %p202 = por %p200, %p201
      %p204 = scmp.ne.s32.totalorder %s187, %s203
      %p205 = scmp.eq.s32.totalorder %s27, 0
      %p206 = por %p204, %p205
      %p207 = scmp.le.s32.totalorder 1, %s21
      %p208 = scmp.lt.s32.totalorder %s21, 5
      %p209 = pnand %p207, %p208
      %p210 = pneg %p209
      // Predicated region
      $region9: #{tpu_custom_call.1} parent=5 // pred_check
        _
      $region10: #{tpu_custom_call.1} parent=5 // pred_check_branch
        %212 = sbr.rel (%p209) target = $region12
      $region11: #{tpu_custom_call.1} parent=5 // pred_region
        %s213 = ssub.s32 %s21, 1
        // Predicated region
        $region13: #{tpu_custom_call.1} parent=11 // pred_check
          %p214 = pneg %p68
        $region14: #{tpu_custom_call.1} parent=11 // pred_check_branch
          %216 = sbr.rel (%p214) target = $region16
        $region15: #{tpu_custom_call.1} parent=11 // pred_region
          %s218 = ssub.s32 2048, 2048
          %219 = vsyncadd [#allocation6], %s218
          %s220 = sshll.u32 [#allocation5], 4
          %s221 = int_to_ptr.vmem [resolvable:$true] %s220
          %226 = dma.hbm_to_vmem [thread:$0]  %s1, 2048, %s221, [#allocation6], 128, 128, 8
        $region16: #{tpu_custom_call.1} parent=11 // pred_fallthru
          _
        // Predicated region
        $region17: #{tpu_custom_call.1} parent=11 // pred_check
          %p227 = pneg %p89
        $region18: #{tpu_custom_call.1} parent=11 // pred_check_branch
          %229 = sbr.rel (%p227) target = $region20
        $region19: #{tpu_custom_call.1} parent=11 // pred_region
          _
        $region20: #{tpu_custom_call.1} parent=11 // pred_fallthru
          _
        // Predicated region
        $region21: #{tpu_custom_call.1} parent=11 // pred_check
          %p230 = pneg %p110
        $region22: #{tpu_custom_call.1} parent=11 // pred_check_branch
          %232 = sbr.rel (%p230) target = $region24
        $region23: #{tpu_custom_call.1} parent=11 // pred_region
          %s234 = ssub.s32 6144, 6144
          %235 = vsyncadd [#allocation6], %s234
          %s236 = sshll.u32 [#allocation7], 4
          %s237 = int_to_ptr.vmem [resolvable:$true] %s236
          %242 = dma.hbm_to_vmem [thread:$0]  %s3, 6144, %s237, [#allocation6], 128, 128, 8
        $region24: #{tpu_custom_call.1} parent=11 // pred_fallthru
          _
        // Predicated region
        $region25: #{tpu_custom_call.1} parent=11 // pred_check
          %p243 = pneg %p131
        $region26: #{tpu_custom_call.1} parent=11 // pred_check_branch
          %245 = sbr.rel (%p243) target = $region28
        $region27: #{tpu_custom_call.1} parent=11 // pred_region
          _
        $region28: #{tpu_custom_call.1} parent=11 // pred_fallthru
          _
        // Predicated region
        $region29: #{tpu_custom_call.1} parent=11 // pred_check
          %p246 = pneg %p152
        $region30: #{tpu_custom_call.1} parent=11 // pred_check_branch
          %248 = sbr.rel (%p246) target = $region32
        $region31: #{tpu_custom_call.1} parent=11 // pred_region
          %s250 = ssub.s32 2048, 2048
          %251 = vsyncadd [#allocation9], %s250
          %s252 = sshll.u32 [#allocation8], 4
          %s253 = int_to_ptr.vmem [resolvable:$true] %s252
          %258 = dma.hbm_to_vmem [thread:$0]  %s5, 2048, %s253, [#allocation9], 128, 128, 8
        $region32: #{tpu_custom_call.1} parent=11 // pred_fallthru
          _
        // Predicated region
        $region33: #{tpu_custom_call.1} parent=11 // pred_check
          %p259 = pneg %p173
        $region34: #{tpu_custom_call.1} parent=11 // pred_check_branch
          %261 = sbr.rel (%p259) target = $region36
        $region35: #{tpu_custom_call.1} parent=11 // pred_region
          _
        $region36: #{tpu_custom_call.1} parent=11 // pred_fallthru
          _
      $region12: #{tpu_custom_call.1} parent=5 // pred_fallthru
        _
      %p262 = scmp.lt.s32.totalorder %s21, 4
      // Predicated region
      $region37: #{tpu_custom_call.1} parent=5 // pred_check
        %p263 = pneg %p262
      $region38: #{tpu_custom_call.1} parent=5 // pred_check_branch
        %265 = sbr.rel (%p263) target = $region40
      $region39: #{tpu_custom_call.1} parent=5 // pred_region
        // Predicated region
        $region41: #{tpu_custom_call.1} parent=39 // pred_check
          %p266 = pneg %p41
        $region42: #{tpu_custom_call.1} parent=39 // pred_check_branch
          %268 = sbr.rel (%p266) target = $region44
        $region43: #{tpu_custom_call.1} parent=39 // pred_region
          %s269 = sand.u32 %s31, 1
          %s270 = scalar_lea.sflag [#allocation3], %s269
          %s271 = sand.u32 %s31, 1
          %s272 = smul.addr %s271, 64
          %s273 = scalar_lea.vmem [#allocation2], %s272
          %s274 = smul.u32 8, %s21
          %s276 = ssub.s32 1024, 1024
          %277 = vsyncadd %s270, %s276
          %s278 = smul.addr %s274, 128
          %s279 = scalar_lea.hbm %s0, %s278
          %s280 = sshll.u32 %s273, 4
          %s281 = int_to_ptr.vmem [resolvable:$true] %s280
          %286 = dma.hbm_to_vmem [thread:$0]  %s279, 1024, %s281, %s270, 128, 128, 8
        $region44: #{tpu_custom_call.1} parent=39 // pred_fallthru
          _
      $region40: #{tpu_custom_call.1} parent=5 // pred_fallthru
        _
      %p287 = scmp.le.s32.totalorder 1, %s21
      %p288 = scmp.lt.s32.totalorder %s21, 5
      %p289 = pnand %p287, %p288
      %p290 = pneg %p289
      // Predicated region
      $region45: #{tpu_custom_call.1} parent=5 // pred_check
        _
      $region46: #{tpu_custom_call.1} parent=5 // pred_check_branch
        %292 = sbr.rel (%p289) target = $region48
      $region47: #{tpu_custom_call.1} parent=5 // pred_region
        %s293 = ssub.s32 %s21, 1
        %s294 = sand.u32 %s34, 1
        %s295 = scalar_lea.sflag [#allocation3], %s294
        %s296 = sand.u32 %s34, 1
        %s297 = smul.addr %s296, 64
        %s298 = scalar_lea.vmem [#allocation2], %s297
        // Predicated region
        $region49: #{tpu_custom_call.1} parent=47 // pred_check
          %p299 = pneg %p47
        $region50: #{tpu_custom_call.1} parent=47 // pred_check_branch
          %301 = sbr.rel (%p299) target = $region52
        $region51: #{tpu_custom_call.1} parent=47 // pred_region
          %302 = dma.done %s295, 1024
        $region52: #{tpu_custom_call.1} parent=47 // pred_fallthru
          _
        // Predicated region
        $region53: #{tpu_custom_call.1} parent=47 // pred_check
          %p303 = pneg %p68
        $region54: #{tpu_custom_call.1} parent=47 // pred_check_branch
          %305 = sbr.rel (%p303) target = $region56
        $region55: #{tpu_custom_call.1} parent=47 // pred_region
          %306 = dma.done [#allocation6], 2048
        $region56: #{tpu_custom_call.1} parent=47 // pred_fallthru
          _
        // Predicated region
        $region57: #{tpu_custom_call.1} parent=47 // pred_check
          %p307 = pneg %p110
        $region58: #{tpu_custom_call.1} parent=47 // pred_check_branch
          %309 = sbr.rel (%p307) target = $region60
        $region59: #{tpu_custom_call.1} parent=47 // pred_region
          %310 = dma.done [#allocation6], 6144
        $region60: #{tpu_custom_call.1} parent=47 // pred_fallthru
          _
        // Predicated region
        $region61: #{tpu_custom_call.1} parent=47 // pred_check
          %p311 = pneg %p152
        $region62: #{tpu_custom_call.1} parent=47 // pred_check_branch
          %313 = sbr.rel (%p311) target = $region64
        $region63: #{tpu_custom_call.1} parent=47 // pred_region
          %314 = dma.done [#allocation9], 2048
        $region64: #{tpu_custom_call.1} parent=47 // pred_fallthru
          _
        %s315 = sand.u32 %s34, 1
        %s316 = scalar_lea.sflag [#allocation3], %s315
        %s317 = sand.u32 %s34, 1
        %s318 = smul.addr %s317, 64
        %s319 = scalar_lea.vmem [#allocation2], %s318
        %p320 = pneg %p47
        %p321 = pneg %p44
        %p322 = pneg %p68
        %p323 = pneg %p65
        %p324 = pneg %p89
        %p325 = pneg %p86
        %p326 = pneg %p110
        %p327 = pneg %p107
        %p328 = pneg %p131
        %p329 = pneg %p128
        %p330 = pneg %p152
        %p331 = pneg %p149
        %p332 = pneg %p173
        %p333 = pneg %p170
        %p334 = pneg %p199
        %p335 = pneg %p196
        %s336 = sand.u32 %s186, 1
        %s337 = scalar_lea.sflag [#allocation4], %s336
        %s338 = sand.u32 %s186, 1
        %s339 = smul.addr %s338, 64
        %s340 = scalar_lea.vmem [#allocation10], %s339
        %s341 = smul.u32 8, %s26
        %s342 = smul.u32 8, %s26
        %v343 = vld [vmem:[%s298] sm:$0xff]
        %v344 = vld [vmem:[%s298 + $0x8] sm:$0xff]
        %v345 = vld [vmem:[%s298 + $0x10] sm:$0xff]
        %v346 = vld [vmem:[%s298 + $0x18] sm:$0xff]
        %v347 = vld [vmem:[%s298 + $0x20] sm:$0xff]
        %v348 = vld [vmem:[%s298 + $0x28] sm:$0xff]
        %v349 = vld [vmem:[%s298 + $0x30] sm:$0xff]
        %v350 = vld [vmem:[%s298 + $0x38] sm:$0xff]
        %v351 = vld [vmem:[#allocation5] sm:$0xff]
        %v352 = vld [vmem:[#allocation5 + $0x8] sm:$0xff]
        %v353 = vld [vmem:[#allocation5 + $0x10] sm:$0xff]
        %v354 = vld [vmem:[#allocation5 + $0x18] sm:$0xff]
        %v355 = vld [vmem:[#allocation5 + $0x20] sm:$0xff]
        %v356 = vld [vmem:[#allocation5 + $0x28] sm:$0xff]
        %v357 = vld [vmem:[#allocation5 + $0x30] sm:$0xff]
        %v358 = vld [vmem:[#allocation5 + $0x38] sm:$0xff]
        %v359 = vld [vmem:[#allocation5 + $0x40] sm:$0xff]
        %v360 = vld [vmem:[#allocation5 + $0x48] sm:$0xff]
        %v361 = vld [vmem:[#allocation5 + $0x50] sm:$0xff]
        %v362 = vld [vmem:[#allocation5 + $0x58] sm:$0xff]
        %v363 = vld [vmem:[#allocation5 + $0x60] sm:$0xff]
        %v364 = vld [vmem:[#allocation5 + $0x68] sm:$0xff]
        %v365 = vld [vmem:[#allocation5 + $0x70] sm:$0xff]
        %v366 = vld [vmem:[#allocation5 + $0x78] sm:$0xff]
        %v367 = vld [vmem:[%s2] sm:$0x1]
        %v369 = vlaneseq
        %v370 = vshrl.u32 %v369, 7
        %v371 = vsub.s32 0, %v370
        %v372 = vrot.slane %v367, %v371
        %374 = vmatprep.subr.mxu0 0.0
        %375 = vmatpush1.msra.mxu0 %v351
        %376 = vmatprep.subr.mxu0 0.0
        %377 = vmatpush1.msra.mxu0 %v352
        %378 = vmatprep.subr.mxu0 0.0
        %379 = vmatpush1.msra.mxu0 %v353
        %380 = vmatprep.subr.mxu0 0.0
        %381 = vmatpush1.msra.mxu0 %v354
        %382 = vmatprep.subr.mxu0 0.0
        %383 = vmatpush1.msra.mxu0 %v355
        %384 = vmatprep.subr.mxu0 0.0
        %385 = vmatpush1.msra.mxu0 %v356
        %386 = vmatprep.subr.mxu0 0.0
        %387 = vmatpush1.msra.mxu0 %v357
        %388 = vmatprep.subr.mxu0 0.0
        %389 = vmatpush1.msra.mxu0 %v358
        %390 = vmatprep.subr.mxu0 0.0
        %391 = vmatpush1.msra.mxu0 %v359
        %392 = vmatprep.subr.mxu0 0.0
        %393 = vmatpush1.msra.mxu0 %v360
        %394 = vmatprep.subr.mxu0 0.0
        %395 = vmatpush1.msra.mxu0 %v361
        %396 = vmatprep.subr.mxu0 0.0
        %397 = vmatpush1.msra.mxu0 %v362
        %398 = vmatprep.subr.mxu0 0.0
        %399 = vmatpush1.msra.mxu0 %v363
        %400 = vmatprep.subr.mxu0 0.0
        %401 = vmatpush1.msra.mxu0 %v364
        %402 = vmatprep.subr.mxu0 0.0
        %403 = vmatpush1.msra.mxu0 %v365
        %404 = vmatprep.subr.mxu0 0.0
        %405 = vmatpush1.msra.mxu0 %v366
        %406 = vmatprep.subr.mxu0 0.0
        %407 = vmatpush1.msra.mxu0 0.0
        %408 = vmatprep.subr.mxu0 0.0
        %409 = vmatpush1.msra.mxu0 0.0
        %410 = vmatprep.subr.mxu0 0.0
        %411 = vmatpush1.msra.mxu0 0.0
        %412 = vmatprep.subr.mxu0 0.0
        %413 = vmatpush1.msra.mxu0 0.0
        %414 = vmatprep.subr.mxu0 0.0
        %415 = vmatpush1.msra.mxu0 0.0
        %416 = vmatprep.subr.mxu0 0.0
        %417 = vmatpush1.msra.mxu0 0.0
        %418 = vmatprep.subr.mxu0 0.0
        %419 = vmatpush1.msra.mxu0 0.0
        %420 = vmatprep.subr.mxu0 0.0
        %421 = vmatpush1.msra.mxu0 0.0
        %422 = vmatprep.subr.mxu0 0.0
        %423 = vmatpush1.msra.mxu0 0.0
        %424 = vmatprep.subr.mxu0 0.0
        %425 = vmatpush1.msra.mxu0 0.0
        %426 = vmatprep.subr.mxu0 0.0
        %427 = vmatpush1.msra.mxu0 0.0
        %428 = vmatprep.subr.mxu0 0.0
        %429 = vmatpush1.msra.mxu0 0.0
        %430 = vmatprep.subr.mxu0 0.0
        %431 = vmatpush1.msra.mxu0 0.0
        %432 = vmatprep.subr.mxu0 0.0
        %433 = vmatpush1.msra.mxu0 0.0
        %434 = vmatprep.subr.mxu0 0.0
        %435 = vmatpush1.msra.mxu0 0.0
        %436 = vmatprep.subr.mxu0 0.0
        %437 = vmatpush1.msra.mxu0 0.0
        %438 = vmatprep.mubr.f32.mxu0 0.0
        %439 = vmatmul.mubr.f32.gmra.mrb[0].mxu0 %v343
        %v440 = vpop.f32.mrb[0].mxu0
        %v441 = vadd.f32 %v372, %v440
        %v442 = vpop.f32.mrb[0].mxu0
        %443 = vmatprep.mubr.f32.mxu0 0.0
        %444 = vmatmul.mubr.f32.gmra.mrb[0].mxu0 %v344
        %v445 = vpop.f32.mrb[0].mxu0
        %v446 = vadd.f32 %v372, %v445
        %v447 = vpop.f32.mrb[0].mxu0
        %448 = vmatprep.mubr.f32.mxu0 0.0
        %449 = vmatmul.mubr.f32.gmra.mrb[0].mxu0 %v345
        %v450 = vpop.f32.mrb[0].mxu0
        %v451 = vadd.f32 %v372, %v450
        %v452 = vpop.f32.mrb[0].mxu0
        %453 = vmatprep.mubr.f32.mxu0 0.0
        %454 = vmatmul.mubr.f32.gmra.mrb[0].mxu0 %v346
        %v455 = vpop.f32.mrb[0].mxu0
        %v456 = vadd.f32 %v372, %v455
        %v457 = vpop.f32.mrb[0].mxu0
        %458 = vmatprep.mubr.f32.mxu0 0.0
        %459 = vmatmul.mubr.f32.gmra.mrb[0].mxu0 %v347
        %v460 = vpop.f32.mrb[0].mxu0
        %v461 = vadd.f32 %v372, %v460
        %v462 = vpop.f32.mrb[0].mxu0
        %463 = vmatprep.mubr.f32.mxu0 0.0
        %464 = vmatmul.mubr.f32.gmra.mrb[0].mxu0 %v348
        %v465 = vpop.f32.mrb[0].mxu0
        %v466 = vadd.f32 %v372, %v465
        %v467 = vpop.f32.mrb[0].mxu0
        %468 = vmatprep.mubr.f32.mxu0 0.0
        %469 = vmatmul.mubr.f32.gmra.mrb[0].mxu0 %v349
        %v470 = vpop.f32.mrb[0].mxu0
        %v471 = vadd.f32 %v372, %v470
        %v472 = vpop.f32.mrb[0].mxu0
        %473 = vmatprep.mubr.f32.mxu0 0.0
        %474 = vmatmul.mubr.f32.gmra.mrb[0].mxu0 %v350
        %v475 = vpop.f32.mrb[0].mxu0
        %v476 = vadd.f32 %v372, %v475
        %v477 = vpop.f32.mrb[0].mxu0
        %478 = vdwg.mxu0
        %v479 = vmax.f32 %v441, 0.0
        %v480 = vmax.f32 %v446, 0.0
        %v481 = vmax.f32 %v451, 0.0
        %v482 = vmax.f32 %v456, 0.0
        %v483 = vmax.f32 %v461, 0.0
        %v484 = vmax.f32 %v466, 0.0
        %v485 = vmax.f32 %v471, 0.0
        %v486 = vmax.f32 %v476, 0.0
        %v487 = vld [vmem:[#allocation7] sm:$0xff]
        %v488 = vld [vmem:[#allocation7 + $0x8] sm:$0xff]
        %v489 = vld [vmem:[#allocation7 + $0x10] sm:$0xff]
        %v490 = vld [vmem:[#allocation7 + $0x18] sm:$0xff]
        %v491 = vld [vmem:[#allocation7 + $0x20] sm:$0xff]
        %v492 = vld [vmem:[#allocation7 + $0x28] sm:$0xff]
        %v493 = vld [vmem:[#allocation7 + $0x30] sm:$0xff]
        %v494 = vld [vmem:[#allocation7 + $0x38] sm:$0xff]
        %v495 = vld [vmem:[#allocation7 + $0x40] sm:$0xff]
        %v496 = vld [vmem:[#allocation7 + $0x48] sm:$0xff]
        %v497 = vld [vmem:[#allocation7 + $0x50] sm:$0xff]
        %v498 = vld [vmem:[#allocation7 + $0x58] sm:$0xff]
        %v499 = vld [vmem:[#allocation7 + $0x60] sm:$0xff]
        %v500 = vld [vmem:[#allocation7 + $0x68] sm:$0xff]
        %v501 = vld [vmem:[#allocation7 + $0x70] sm:$0xff]
        %v502 = vld [vmem:[#allocation7 + $0x78] sm:$0xff]
        %v503 = vld [vmem:[%s4] sm:$0x1]
        %v505 = vlaneseq
        %v506 = vshrl.u32 %v505, 7
        %v507 = vsub.s32 0, %v506
        %v508 = vrot.slane %v503, %v507
        %510 = vmatprep.subr.mxu0 0.0
        %511 = vmatpush1.msra.mxu0 %v487
        %512 = vmatprep.subr.mxu0 0.0
        %513 = vmatpush1.msra.mxu0 %v488
        %514 = vmatprep.subr.mxu0 0.0
        %515 = vmatpush1.msra.mxu0 %v489
        %516 = vmatprep.subr.mxu0 0.0
        %517 = vmatpush1.msra.mxu0 %v490
        %518 = vmatprep.subr.mxu0 0.0
        %519 = vmatpush1.msra.mxu0 %v491
        %520 = vmatprep.subr.mxu0 0.0
        %521 = vmatpush1.msra.mxu0 %v492
        %522 = vmatprep.subr.mxu0 0.0
        %523 = vmatpush1.msra.mxu0 %v493
        %524 = vmatprep.subr.mxu0 0.0
        %525 = vmatpush1.msra.mxu0 %v494
        %526 = vmatprep.subr.mxu0 0.0
        %527 = vmatpush1.msra.mxu0 %v495
        %528 = vmatprep.subr.mxu0 0.0
        %529 = vmatpush1.msra.mxu0 %v496
        %530 = vmatprep.subr.mxu0 0.0
        %531 = vmatpush1.msra.mxu0 %v497
        %532 = vmatprep.subr.mxu0 0.0
        %533 = vmatpush1.msra.mxu0 %v498
        %534 = vmatprep.subr.mxu0 0.0
        %535 = vmatpush1.msra.mxu0 %v499
        %536 = vmatprep.subr.mxu0 0.0
        %537 = vmatpush1.msra.mxu0 %v500
        %538 = vmatprep.subr.mxu0 0.0
        %539 = vmatpush1.msra.mxu0 %v501
        %540 = vmatprep.subr.mxu0 0.0
        %541 = vmatpush1.msra.mxu0 %v502
        %542 = vmatprep.subr.mxu0 0.0
        %543 = vmatpush1.msra.mxu0 0.0
        %544 = vmatprep.subr.mxu0 0.0
        %545 = vmatpush1.msra.mxu0 0.0
        %546 = vmatprep.subr.mxu0 0.0
        %547 = vmatpush1.msra.mxu0 0.0
        %548 = vmatprep.subr.mxu0 0.0
        %549 = vmatpush1.msra.mxu0 0.0
        %550 = vmatprep.subr.mxu0 0.0
        %551 = vmatpush1.msra.mxu0 0.0
        %552 = vmatprep.subr.mxu0 0.0
        %553 = vmatpush1.msra.mxu0 0.0
        %554 = vmatprep.subr.mxu0 0.0
        %555 = vmatpush1.msra.mxu0 0.0
        %556 = vmatprep.subr.mxu0 0.0
        %557 = vmatpush1.msra.mxu0 0.0
        %558 = vmatprep.subr.mxu0 0.0
        %559 = vmatpush1.msra.mxu0 0.0
        %560 = vmatprep.subr.mxu0 0.0
        %561 = vmatpush1.msra.mxu0 0.0
        %562 = vmatprep.subr.mxu0 0.0
        %563 = vmatpush1.msra.mxu0 0.0
        %564 = vmatprep.subr.mxu0 0.0
        %565 = vmatpush1.msra.mxu0 0.0
        %566 = vmatprep.subr.mxu0 0.0
        %567 = vmatpush1.msra.mxu0 0.0
        %568 = vmatprep.subr.mxu0 0.0
        %569 = vmatpush1.msra.mxu0 0.0
        %570 = vmatprep.subr.mxu0 0.0
        %571 = vmatpush1.msra.mxu0 0.0
        %572 = vmatprep.subr.mxu0 0.0
        %573 = vmatpush1.msra.mxu0 0.0
        %574 = vmatprep.mubr.f32.mxu0 0.0
        %575 = vmatmul.mubr.f32.gmra.mrb[0].mxu0 %v479
        %v576 = vpop.f32.mrb[0].mxu0
        %v577 = vadd.f32 %v508, %v576
        %v578 = vpop.f32.mrb[0].mxu0
        %579 = vmatprep.mubr.f32.mxu0 0.0
        %580 = vmatmul.mubr.f32.gmra.mrb[0].mxu0 %v480
        %v581 = vpop.f32.mrb[0].mxu0
        %v582 = vadd.f32 %v508, %v581
        %v583 = vpop.f32.mrb[0].mxu0
        %584 = vmatprep.mubr.f32.mxu0 0.0
        %585 = vmatmul.mubr.f32.gmra.mrb[0].mxu0 %v481
        %v586 = vpop.f32.mrb[0].mxu0
        %v587 = vadd.f32 %v508, %v586
        %v588 = vpop.f32.mrb[0].mxu0
        %589 = vmatprep.mubr.f32.mxu0 0.0
        %590 = vmatmul.mubr.f32.gmra.mrb[0].mxu0 %v482
        %v591 = vpop.f32.mrb[0].mxu0
        %v592 = vadd.f32 %v508, %v591
        %v593 = vpop.f32.mrb[0].mxu0
        %594 = vmatprep.mubr.f32.mxu0 0.0
        %595 = vmatmul.mubr.f32.gmra.mrb[0].mxu0 %v483
        %v596 = vpop.f32.mrb[0].mxu0
        %v597 = vadd.f32 %v508, %v596
        %v598 = vpop.f32.mrb[0].mxu0
        %599 = vmatprep.mubr.f32.mxu0 0.0
        %600 = vmatmul.mubr.f32.gmra.mrb[0].mxu0 %v484
        %v601 = vpop.f32.mrb[0].mxu0
        %v602 = vadd.f32 %v508, %v601
        %v603 = vpop.f32.mrb[0].mxu0
        %604 = vmatprep.mubr.f32.mxu0 0.0
        %605 = vmatmul.mubr.f32.gmra.mrb[0].mxu0 %v485
        %v606 = vpop.f32.mrb[0].mxu0
        %v607 = vadd.f32 %v508, %v606
        %v608 = vpop.f32.mrb[0].mxu0
        %609 = vmatprep.mubr.f32.mxu0 0.0
        %610 = vmatmul.mubr.f32.gmra.mrb[0].mxu0 %v486
        %v611 = vpop.f32.mrb[0].mxu0
        %v612 = vadd.f32 %v508, %v611
        %v613 = vpop.f32.mrb[0].mxu0
        %614 = vdwg.mxu0
        %v615 = vmax.f32 %v577, 0.0
        %v616 = vmax.f32 %v582, 0.0
        %v617 = vmax.f32 %v587, 0.0
        %v618 = vmax.f32 %v592, 0.0
        %v619 = vmax.f32 %v597, 0.0
        %v620 = vmax.f32 %v602, 0.0
        %v621 = vmax.f32 %v607, 0.0
        %v622 = vmax.f32 %v612, 0.0
        %s623 = scalar_lea.vmem [#allocation7], 128
        %v624 = vld [vmem:[%s623] sm:$0xff]
        %v625 = vld [vmem:[%s623 + $0x8] sm:$0xff]
        %v626 = vld [vmem:[%s623 + $0x10] sm:$0xff]
        %v627 = vld [vmem:[%s623 + $0x18] sm:$0xff]
        %v628 = vld [vmem:[%s623 + $0x20] sm:$0xff]
        %v629 = vld [vmem:[%s623 + $0x28] sm:$0xff]
        %v630 = vld [vmem:[%s623 + $0x30] sm:$0xff]
        %v631 = vld [vmem:[%s623 + $0x38] sm:$0xff]
        %v632 = vld [vmem:[%s623 + $0x40] sm:$0xff]
        %v633 = vld [vmem:[%s623 + $0x48] sm:$0xff]
        %v634 = vld [vmem:[%s623 + $0x50] sm:$0xff]
        %v635 = vld [vmem:[%s623 + $0x58] sm:$0xff]
        %v636 = vld [vmem:[%s623 + $0x60] sm:$0xff]
        %v637 = vld [vmem:[%s623 + $0x68] sm:$0xff]
        %v638 = vld [vmem:[%s623 + $0x70] sm:$0xff]
        %v639 = vld [vmem:[%s623 + $0x78] sm:$0xff]
        %s640 = scalar_lea.vmem %s4, 1
        %v641 = vld [vmem:[%s640] sm:$0x1]
        %v643 = vlaneseq
        %v644 = vshrl.u32 %v643, 7
        %v645 = vsub.s32 0, %v644
        %v646 = vrot.slane %v641, %v645
        %648 = vmatprep.subr.mxu0 0.0
        %649 = vmatpush1.msra.mxu0 %v624
        %650 = vmatprep.subr.mxu0 0.0
        %651 = vmatpush1.msra.mxu0 %v625
        %652 = vmatprep.subr.mxu0 0.0
        %653 = vmatpush1.msra.mxu0 %v626
        %654 = vmatprep.subr.mxu0 0.0
        %655 = vmatpush1.msra.mxu0 %v627
        %656 = vmatprep.subr.mxu0 0.0
        %657 = vmatpush1.msra.mxu0 %v628
        %658 = vmatprep.subr.mxu0 0.0
        %659 = vmatpush1.msra.mxu0 %v629
        %660 = vmatprep.subr.mxu0 0.0
        %661 = vmatpush1.msra.mxu0 %v630
        %662 = vmatprep.subr.mxu0 0.0
        %663 = vmatpush1.msra.mxu0 %v631
        %664 = vmatprep.subr.mxu0 0.0
        %665 = vmatpush1.msra.mxu0 %v632
        %666 = vmatprep.subr.mxu0 0.0
        %667 = vmatpush1.msra.mxu0 %v633
        %668 = vmatprep.subr.mxu0 0.0
        %669 = vmatpush1.msra.mxu0 %v634
        %670 = vmatprep.subr.mxu0 0.0
        %671 = vmatpush1.msra.mxu0 %v635
        %672 = vmatprep.subr.mxu0 0.0
        %673 = vmatpush1.msra.mxu0 %v636
        %674 = vmatprep.subr.mxu0 0.0
        %675 = vmatpush1.msra.mxu0 %v637
        %676 = vmatprep.subr.mxu0 0.0
        %677 = vmatpush1.msra.mxu0 %v638
        %678 = vmatprep.subr.mxu0 0.0
        %679 = vmatpush1.msra.mxu0 %v639
        %680 = vmatprep.subr.mxu0 0.0
        %681 = vmatpush1.msra.mxu0 0.0
        %682 = vmatprep.subr.mxu0 0.0
        %683 = vmatpush1.msra.mxu0 0.0
        %684 = vmatprep.subr.mxu0 0.0
        %685 = vmatpush1.msra.mxu0 0.0
        %686 = vmatprep.subr.mxu0 0.0
        %687 = vmatpush1.msra.mxu0 0.0
        %688 = vmatprep.subr.mxu0 0.0
        %689 = vmatpush1.msra.mxu0 0.0
        %690 = vmatprep.subr.mxu0 0.0
        %691 = vmatpush1.msra.mxu0 0.0
        %692 = vmatprep.subr.mxu0 0.0
        %693 = vmatpush1.msra.mxu0 0.0
        %694 = vmatprep.subr.mxu0 0.0
        %695 = vmatpush1.msra.mxu0 0.0
        %696 = vmatprep.subr.mxu0 0.0
        %697 = vmatpush1.msra.mxu0 0.0
        %698 = vmatprep.subr.mxu0 0.0
        %699 = vmatpush1.msra.mxu0 0.0
        %700 = vmatprep.subr.mxu0 0.0
        %701 = vmatpush1.msra.mxu0 0.0
        %702 = vmatprep.subr.mxu0 0.0
        %703 = vmatpush1.msra.mxu0 0.0
        %704 = vmatprep.subr.mxu0 0.0
        %705 = vmatpush1.msra.mxu0 0.0
        %706 = vmatprep.subr.mxu0 0.0
        %707 = vmatpush1.msra.mxu0 0.0
        %708 = vmatprep.subr.mxu0 0.0
        %709 = vmatpush1.msra.mxu0 0.0
        %710 = vmatprep.subr.mxu0 0.0
        %711 = vmatpush1.msra.mxu0 0.0
        %712 = vmatprep.mubr.f32.mxu0 0.0
        %713 = vmatmul.mubr.f32.gmra.mrb[0].mxu0 %v615
        %v714 = vpop.f32.mrb[0].mxu0
        %v715 = vadd.f32 %v646, %v714
        %v716 = vpop.f32.mrb[0].mxu0
        %717 = vmatprep.mubr.f32.mxu0 0.0
        %718 = vmatmul.mubr.f32.gmra.mrb[0].mxu0 %v616
        %v719 = vpop.f32.mrb[0].mxu0
        %v720 = vadd.f32 %v646, %v719
        %v721 = vpop.f32.mrb[0].mxu0
        %722 = vmatprep.mubr.f32.mxu0 0.0
        %723 = vmatmul.mubr.f32.gmra.mrb[0].mxu0 %v617
        %v724 = vpop.f32.mrb[0].mxu0
        %v725 = vadd.f32 %v646, %v724
        %v726 = vpop.f32.mrb[0].mxu0
        %727 = vmatprep.mubr.f32.mxu0 0.0
        %728 = vmatmul.mubr.f32.gmra.mrb[0].mxu0 %v618
        %v729 = vpop.f32.mrb[0].mxu0
        %v730 = vadd.f32 %v646, %v729
        %v731 = vpop.f32.mrb[0].mxu0
        %732 = vmatprep.mubr.f32.mxu0 0.0
        %733 = vmatmul.mubr.f32.gmra.mrb[0].mxu0 %v619
        %v734 = vpop.f32.mrb[0].mxu0
        %v735 = vadd.f32 %v646, %v734
        %v736 = vpop.f32.mrb[0].mxu0
        %737 = vmatprep.mubr.f32.mxu0 0.0
        %738 = vmatmul.mubr.f32.gmra.mrb[0].mxu0 %v620
        %v739 = vpop.f32.mrb[0].mxu0
        %v740 = vadd.f32 %v646, %v739
        %v741 = vpop.f32.mrb[0].mxu0
        %742 = vmatprep.mubr.f32.mxu0 0.0
        %743 = vmatmul.mubr.f32.gmra.mrb[0].mxu0 %v621
        %v744 = vpop.f32.mrb[0].mxu0
        %v745 = vadd.f32 %v646, %v744
        %v746 = vpop.f32.mrb[0].mxu0
        %747 = vmatprep.mubr.f32.mxu0 0.0
        %748 = vmatmul.mubr.f32.gmra.mrb[0].mxu0 %v622
        %v749 = vpop.f32.mrb[0].mxu0
        %v750 = vadd.f32 %v646, %v749
        %v751 = vpop.f32.mrb[0].mxu0
        %752 = vdwg.mxu0
        %v753 = vmax.f32 %v715, 0.0
        %v754 = vmax.f32 %v720, 0.0
        %v755 = vmax.f32 %v725, 0.0
        %v756 = vmax.f32 %v730, 0.0
        %v757 = vmax.f32 %v735, 0.0
        %v758 = vmax.f32 %v740, 0.0
        %v759 = vmax.f32 %v745, 0.0
        %v760 = vmax.f32 %v750, 0.0
        %s761 = scalar_lea.vmem [#allocation7], 256
        %v762 = vld [vmem:[%s761] sm:$0xff]
        %v763 = vld [vmem:[%s761 + $0x8] sm:$0xff]
        %v764 = vld [vmem:[%s761 + $0x10] sm:$0xff]
        %v765 = vld [vmem:[%s761 + $0x18] sm:$0xff]
        %v766 = vld [vmem:[%s761 + $0x20] sm:$0xff]
        %v767 = vld [vmem:[%s761 + $0x28] sm:$0xff]
        %v768 = vld [vmem:[%s761 + $0x30] sm:$0xff]
        %v769 = vld [vmem:[%s761 + $0x38] sm:$0xff]
        %v770 = vld [vmem:[%s761 + $0x40] sm:$0xff]
        %v771 = vld [vmem:[%s761 + $0x48] sm:$0xff]
        %v772 = vld [vmem:[%s761 + $0x50] sm:$0xff]
        %v773 = vld [vmem:[%s761 + $0x58] sm:$0xff]
        %v774 = vld [vmem:[%s761 + $0x60] sm:$0xff]
        %v775 = vld [vmem:[%s761 + $0x68] sm:$0xff]
        %v776 = vld [vmem:[%s761 + $0x70] sm:$0xff]
        %v777 = vld [vmem:[%s761 + $0x78] sm:$0xff]
        %s778 = scalar_lea.vmem %s4, 2
        %v779 = vld [vmem:[%s778] sm:$0x1]
        %v781 = vlaneseq
        %v782 = vshrl.u32 %v781, 7
        %v783 = vsub.s32 0, %v782
        %v784 = vrot.slane %v779, %v783
        %786 = vmatprep.subr.mxu0 0.0
        %787 = vmatpush1.msra.mxu0 %v762
        %788 = vmatprep.subr.mxu0 0.0
        %789 = vmatpush1.msra.mxu0 %v763
        %790 = vmatprep.subr.mxu0 0.0
        %791 = vmatpush1.msra.mxu0 %v764
        %792 = vmatprep.subr.mxu0 0.0
        %793 = vmatpush1.msra.mxu0 %v765
        %794 = vmatprep.subr.mxu0 0.0
        %795 = vmatpush1.msra.mxu0 %v766
        %796 = vmatprep.subr.mxu0 0.0
        %797 = vmatpush1.msra.mxu0 %v767
        %798 = vmatprep.subr.mxu0 0.0
        %799 = vmatpush1.msra.mxu0 %v768
        %800 = vmatprep.subr.mxu0 0.0
        %801 = vmatpush1.msra.mxu0 %v769
        %802 = vmatprep.subr.mxu0 0.0
        %803 = vmatpush1.msra.mxu0 %v770
        %804 = vmatprep.subr.mxu0 0.0
        %805 = vmatpush1.msra.mxu0 %v771
        %806 = vmatprep.subr.mxu0 0.0
        %807 = vmatpush1.msra.mxu0 %v772
        %808 = vmatprep.subr.mxu0 0.0
        %809 = vmatpush1.msra.mxu0 %v773
        %810 = vmatprep.subr.mxu0 0.0
        %811 = vmatpush1.msra.mxu0 %v774
        %812 = vmatprep.subr.mxu0 0.0
        %813 = vmatpush1.msra.mxu0 %v775
        %814 = vmatprep.subr.mxu0 0.0
        %815 = vmatpush1.msra.mxu0 %v776
        %816 = vmatprep.subr.mxu0 0.0
        %817 = vmatpush1.msra.mxu0 %v777
        %818 = vmatprep.subr.mxu0 0.0
        %819 = vmatpush1.msra.mxu0 0.0
        %820 = vmatprep.subr.mxu0 0.0
        %821 = vmatpush1.msra.mxu0 0.0
        %822 = vmatprep.subr.mxu0 0.0
        %823 = vmatpush1.msra.mxu0 0.0
        %824 = vmatprep.subr.mxu0 0.0
        %825 = vmatpush1.msra.mxu0 0.0
        %826 = vmatprep.subr.mxu0 0.0
        %827 = vmatpush1.msra.mxu0 0.0
        %828 = vmatprep.subr.mxu0 0.0
        %829 = vmatpush1.msra.mxu0 0.0
        %830 = vmatprep.subr.mxu0 0.0
        %831 = vmatpush1.msra.mxu0 0.0
        %832 = vmatprep.subr.mxu0 0.0
        %833 = vmatpush1.msra.mxu0 0.0
        %834 = vmatprep.subr.mxu0 0.0
        %835 = vmatpush1.msra.mxu0 0.0
        %836 = vmatprep.subr.mxu0 0.0
        %837 = vmatpush1.msra.mxu0 0.0
        %838 = vmatprep.subr.mxu0 0.0
        %839 = vmatpush1.msra.mxu0 0.0
        %840 = vmatprep.subr.mxu0 0.0
        %841 = vmatpush1.msra.mxu0 0.0
        %842 = vmatprep.subr.mxu0 0.0
        %843 = vmatpush1.msra.mxu0 0.0
        %844 = vmatprep.subr.mxu0 0.0
        %845 = vmatpush1.msra.mxu0 0.0
        %846 = vmatprep.subr.mxu0 0.0
        %847 = vmatpush1.msra.mxu0 0.0
        %848 = vmatprep.subr.mxu0 0.0
        %849 = vmatpush1.msra.mxu0 0.0
        %850 = vmatprep.mubr.f32.mxu0 0.0
        %851 = vmatmul.mubr.f32.gmra.mrb[0].mxu0 %v753
        %v852 = vpop.f32.mrb[0].mxu0
        %v853 = vadd.f32 %v784, %v852
        %v854 = vpop.f32.mrb[0].mxu0
        %855 = vmatprep.mubr.f32.mxu0 0.0
        %856 = vmatmul.mubr.f32.gmra.mrb[0].mxu0 %v754
        %v857 = vpop.f32.mrb[0].mxu0
        %v858 = vadd.f32 %v784, %v857
        %v859 = vpop.f32.mrb[0].mxu0
        %860 = vmatprep.mubr.f32.mxu0 0.0
        %861 = vmatmul.mubr.f32.gmra.mrb[0].mxu0 %v755
        %v862 = vpop.f32.mrb[0].mxu0
        %v863 = vadd.f32 %v784, %v862
        %v864 = vpop.f32.mrb[0].mxu0
        %865 = vmatprep.mubr.f32.mxu0 0.0
        %866 = vmatmul.mubr.f32.gmra.mrb[0].mxu0 %v756
        %v867 = vpop.f32.mrb[0].mxu0
        %v868 = vadd.f32 %v784, %v867
        %v869 = vpop.f32.mrb[0].mxu0
        %870 = vmatprep.mubr.f32.mxu0 0.0
        %871 = vmatmul.mubr.f32.gmra.mrb[0].mxu0 %v757
        %v872 = vpop.f32.mrb[0].mxu0
        %v873 = vadd.f32 %v784, %v872
        %v874 = vpop.f32.mrb[0].mxu0
        %875 = vmatprep.mubr.f32.mxu0 0.0
        %876 = vmatmul.mubr.f32.gmra.mrb[0].mxu0 %v758
        %v877 = vpop.f32.mrb[0].mxu0
        %v878 = vadd.f32 %v784, %v877
        %v879 = vpop.f32.mrb[0].mxu0
        %880 = vmatprep.mubr.f32.mxu0 0.0
        %881 = vmatmul.mubr.f32.gmra.mrb[0].mxu0 %v759
        %v882 = vpop.f32.mrb[0].mxu0
        %v883 = vadd.f32 %v784, %v882
        %v884 = vpop.f32.mrb[0].mxu0
        %885 = vmatprep.mubr.f32.mxu0 0.0
        %886 = vmatmul.mubr.f32.gmra.mrb[0].mxu0 %v760
        %v887 = vpop.f32.mrb[0].mxu0
        %v888 = vadd.f32 %v784, %v887
        %v889 = vpop.f32.mrb[0].mxu0
        %890 = vdwg.mxu0
        %v891 = vmax.f32 %v853, 0.0
        %v892 = vmax.f32 %v858, 0.0
        %v893 = vmax.f32 %v863, 0.0
        %v894 = vmax.f32 %v868, 0.0
        %v895 = vmax.f32 %v873, 0.0
        %v896 = vmax.f32 %v878, 0.0
        %v897 = vmax.f32 %v883, 0.0
        %v898 = vmax.f32 %v888, 0.0
        %v899 = vld [vmem:[#allocation8] sm:$0xff]
        %v900 = vld [vmem:[#allocation8 + $0x8] sm:$0xff]
        %v901 = vld [vmem:[#allocation8 + $0x10] sm:$0xff]
        %v902 = vld [vmem:[#allocation8 + $0x18] sm:$0xff]
        %v903 = vld [vmem:[#allocation8 + $0x20] sm:$0xff]
        %v904 = vld [vmem:[#allocation8 + $0x28] sm:$0xff]
        %v905 = vld [vmem:[#allocation8 + $0x30] sm:$0xff]
        %v906 = vld [vmem:[#allocation8 + $0x38] sm:$0xff]
        %v907 = vld [vmem:[#allocation8 + $0x40] sm:$0xff]
        %v908 = vld [vmem:[#allocation8 + $0x48] sm:$0xff]
        %v909 = vld [vmem:[#allocation8 + $0x50] sm:$0xff]
        %v910 = vld [vmem:[#allocation8 + $0x58] sm:$0xff]
        %v911 = vld [vmem:[#allocation8 + $0x60] sm:$0xff]
        %v912 = vld [vmem:[#allocation8 + $0x68] sm:$0xff]
        %v913 = vld [vmem:[#allocation8 + $0x70] sm:$0xff]
        %v914 = vld [vmem:[#allocation8 + $0x78] sm:$0xff]
        %v915 = vld [vmem:[%s6] sm:$0x1]
        %v917 = vlaneseq
        %v918 = vshrl.u32 %v917, 7
        %v919 = vsub.s32 0, %v918
        %v920 = vrot.slane %v915, %v919
        %922 = vmatprep.subr.mxu0 0.0
        %923 = vmatpush1.msra.mxu0 %v899
        %924 = vmatprep.subr.mxu0 0.0
        %925 = vmatpush1.msra.mxu0 %v900
        %926 = vmatprep.subr.mxu0 0.0
        %927 = vmatpush1.msra.mxu0 %v901
        %928 = vmatprep.subr.mxu0 0.0
        %929 = vmatpush1.msra.mxu0 %v902
        %930 = vmatprep.subr.mxu0 0.0
        %931 = vmatpush1.msra.mxu0 %v903
        %932 = vmatprep.subr.mxu0 0.0
        %933 = vmatpush1.msra.mxu0 %v904
        %934 = vmatprep.subr.mxu0 0.0
        %935 = vmatpush1.msra.mxu0 %v905
        %936 = vmatprep.subr.mxu0 0.0
        %937 = vmatpush1.msra.mxu0 %v906
        %938 = vmatprep.subr.mxu0 0.0
        %939 = vmatpush1.msra.mxu0 %v907
        %940 = vmatprep.subr.mxu0 0.0
        %941 = vmatpush1.msra.mxu0 %v908
        %942 = vmatprep.subr.mxu0 0.0
        %943 = vmatpush1.msra.mxu0 %v909
        %944 = vmatprep.subr.mxu0 0.0
        %945 = vmatpush1.msra.mxu0 %v910
        %946 = vmatprep.subr.mxu0 0.0
        %947 = vmatpush1.msra.mxu0 %v911
        %948 = vmatprep.subr.mxu0 0.0
        %949 = vmatpush1.msra.mxu0 %v912
        %950 = vmatprep.subr.mxu0 0.0
        %951 = vmatpush1.msra.mxu0 %v913
        %952 = vmatprep.subr.mxu0 0.0
        %953 = vmatpush1.msra.mxu0 %v914
        %954 = vmatprep.subr.mxu0 0.0
        %955 = vmatpush1.msra.mxu0 0.0
        %956 = vmatprep.subr.mxu0 0.0
        %957 = vmatpush1.msra.mxu0 0.0
        %958 = vmatprep.subr.mxu0 0.0
        %959 = vmatpush1.msra.mxu0 0.0
        %960 = vmatprep.subr.mxu0 0.0
        %961 = vmatpush1.msra.mxu0 0.0
        %962 = vmatprep.subr.mxu0 0.0
        %963 = vmatpush1.msra.mxu0 0.0
        %964 = vmatprep.subr.mxu0 0.0
        %965 = vmatpush1.msra.mxu0 0.0
        %966 = vmatprep.subr.mxu0 0.0
        %967 = vmatpush1.msra.mxu0 0.0
        %968 = vmatprep.subr.mxu0 0.0
        %969 = vmatpush1.msra.mxu0 0.0
        %970 = vmatprep.subr.mxu0 0.0
        %971 = vmatpush1.msra.mxu0 0.0
        %972 = vmatprep.subr.mxu0 0.0
        %973 = vmatpush1.msra.mxu0 0.0
        %974 = vmatprep.subr.mxu0 0.0
        %975 = vmatpush1.msra.mxu0 0.0
        %976 = vmatprep.subr.mxu0 0.0
        %977 = vmatpush1.msra.mxu0 0.0
        %978 = vmatprep.subr.mxu0 0.0
        %979 = vmatpush1.msra.mxu0 0.0
        %980 = vmatprep.subr.mxu0 0.0
        %981 = vmatpush1.msra.mxu0 0.0
        %982 = vmatprep.subr.mxu0 0.0
        %983 = vmatpush1.msra.mxu0 0.0
        %984 = vmatprep.subr.mxu0 0.0
        %985 = vmatpush1.msra.mxu0 0.0
        %986 = vmatprep.mubr.f32.mxu0 0.0
        %987 = vmatmul.mubr.f32.gmra.mrb[0].mxu0 %v891
        %v988 = vpop.f32.mrb[0].mxu0
        %v989 = vadd.f32 %v920, %v988
        %v990 = vpop.f32.mrb[0].mxu0
        %991 = vmatprep.mubr.f32.mxu0 0.0
        %992 = vmatmul.mubr.f32.gmra.mrb[0].mxu0 %v892
        %v993 = vpop.f32.mrb[0].mxu0
        %v994 = vadd.f32 %v920, %v993
        %v995 = vpop.f32.mrb[0].mxu0
        %996 = vmatprep.mubr.f32.mxu0 0.0
        %997 = vmatmul.mubr.f32.gmra.mrb[0].mxu0 %v893
        %v998 = vpop.f32.mrb[0].mxu0
        %v999 = vadd.f32 %v920, %v998
        %v1000 = vpop.f32.mrb[0].mxu0
        %1001 = vmatprep.mubr.f32.mxu0 0.0
        %1002 = vmatmul.mubr.f32.gmra.mrb[0].mxu0 %v894
        %v1003 = vpop.f32.mrb[0].mxu0
        %v1004 = vadd.f32 %v920, %v1003
        %v1005 = vpop.f32.mrb[0].mxu0
        %1006 = vmatprep.mubr.f32.mxu0 0.0
        %1007 = vmatmul.mubr.f32.gmra.mrb[0].mxu0 %v895
        %v1008 = vpop.f32.mrb[0].mxu0
        %v1009 = vadd.f32 %v920, %v1008
        %v1010 = vpop.f32.mrb[0].mxu0
        %1011 = vmatprep.mubr.f32.mxu0 0.0
        %1012 = vmatmul.mubr.f32.gmra.mrb[0].mxu0 %v896
        %v1013 = vpop.f32.mrb[0].mxu0
        %v1014 = vadd.f32 %v920, %v1013
        %v1015 = vpop.f32.mrb[0].mxu0
        %1016 = vmatprep.mubr.f32.mxu0 0.0
        %1017 = vmatmul.mubr.f32.gmra.mrb[0].mxu0 %v897
        %v1018 = vpop.f32.mrb[0].mxu0
        %v1019 = vadd.f32 %v920, %v1018
        %v1020 = vpop.f32.mrb[0].mxu0
        %1021 = vmatprep.mubr.f32.mxu0 0.0
        %1022 = vmatmul.mubr.f32.gmra.mrb[0].mxu0 %v898
        %v1023 = vpop.f32.mrb[0].mxu0
        %v1024 = vadd.f32 %v920, %v1023
        %v1025 = vpop.f32.mrb[0].mxu0
        %1026 = vdwg.mxu0
        %1027 = vst [vmem:[%s340] sm:$0xff] %v989
        %1028 = vst [vmem:[%s340 + $0x8] sm:$0xff] %v994
        %1029 = vst [vmem:[%s340 + $0x10] sm:$0xff] %v999
        %1030 = vst [vmem:[%s340 + $0x18] sm:$0xff] %v1004
        %1031 = vst [vmem:[%s340 + $0x20] sm:$0xff] %v1009
        %1032 = vst [vmem:[%s340 + $0x28] sm:$0xff] %v1014
        %1033 = vst [vmem:[%s340 + $0x30] sm:$0xff] %v1019
        %1034 = vst [vmem:[%s340 + $0x38] sm:$0xff] %v1024
        %s1035 = sand.u32 %s186, 1
        %s1036 = scalar_lea.sflag [#allocation4], %s1035
        %s1037 = sand.u32 %s186, 1
        %s1038 = smul.addr %s1037, 64
        %s1039 = scalar_lea.vmem [#allocation10], %s1038
        // Predicated region
        $region65: #{tpu_custom_call.1} parent=47 // pred_check
          %p1040 = pneg %p196
        $region66: #{tpu_custom_call.1} parent=47 // pred_check_branch
          %1042 = sbr.rel (%p1040) target = $region68
        $region67: #{tpu_custom_call.1} parent=47 // pred_region
          %s1043 = smul.u32 8, %s26
          %s1045 = ssub.s32 1024, 1024
          %1046 = vsyncadd %s1036, %s1045
          %s1047 = smul.addr %s1043, 128
          %s1048 = scalar_lea.hbm %s7, %s1047
          %s1049 = sshll.u32 %s1039, 4
          %s1050 = int_to_ptr.vmem [resolvable:$true] %s1049
          %1055 = dma.vmem_to_hbm [thread:$0]  %s1050, 1024, %s1048, %s1036, 128, 128, 8
        $region68: #{tpu_custom_call.1} parent=47 // pred_fallthru
          _
      $region48: #{tpu_custom_call.1} parent=5 // pred_fallthru
        _
      %p1056 = scmp.le.s32.totalorder 2, %s21
      // Predicated region
      $region69: #{tpu_custom_call.1} parent=5 // pred_check
        %p1057 = pneg %p1056
      $region70: #{tpu_custom_call.1} parent=5 // pred_check_branch
        %1059 = sbr.rel (%p1057) target = $region72
      $region71: #{tpu_custom_call.1} parent=5 // pred_region
        %s1060 = ssub.s32 %s21, 2
        // Predicated region
        $region73: #{tpu_custom_call.1} parent=71 // pred_check
          %p1061 = pneg %p202
        $region74: #{tpu_custom_call.1} parent=71 // pred_check_branch
          %1063 = sbr.rel (%p1061) target = $region76
        $region75: #{tpu_custom_call.1} parent=71 // pred_region
          %s1064 = sand.u32 %s187, 1
          %s1065 = scalar_lea.sflag [#allocation4], %s1064
          %s1066 = sand.u32 %s187, 1
          %s1067 = smul.addr %s1066, 64
          %s1068 = scalar_lea.vmem [#allocation10], %s1067
          %1069 = dma.done %s1065, 1024
        $region76: #{tpu_custom_call.1} parent=71 // pred_fallthru
          _
      $region72: #{tpu_custom_call.1} parent=5 // pred_fallthru
        _
    $region6: #{tpu_custom_call.1} parent=1 // loop_footer
      %s25 = sadd.s32 1, %s21
    $region7: #{tpu_custom_call.1} parent=1 // loop_footer_branch
      %20 = sbr.rel target = $region3
    $region8: #{tpu_custom_call.1} parent=1 // loop_exit
      _
    %1070 = vsyncpa [#allocation3], 1
    %s1071 = scalar_lea.sflag [#allocation3], 1
    %1072 = vsyncpa %s1071, 1
    %1073 = vsyncpa [#allocation6], 1
    %1074 = vsyncpa [#allocation9], 1
    %1075 = vsyncpa [#allocation4], 1
    %s1076 = scalar_lea.sflag [#allocation4], 1
    %1077 = vsyncpa %s1076, 1

</llo_original>
